<compile_context>
chip_gen: v6e
topology: v6e:2x2x1
jax: 0.10.0
libtpu: 0.0.40
codegen_flags: <defaults>
</compile_context>

<pallas_src>
import functools

import jax
import jax.numpy as jnp
from jax.experimental import pallas as pl
from jax.experimental.pallas import tpu as pltpu


def _mlp_diffusion_kernel(
    t_ref,                    # (TB, 1)   int32 step indices
    x_ref,                    # (TB, 2)   f32 input points
    e0_ref, e1_ref, e2_ref,   # (Np, H)   bias-folded embedding tables
    w0_ref,                   # (2, H)
    w1_ref,                   # (H, H)
    w2_ref,                   # (H, H)
    w3_ref,                   # (H, 2)
    b3_ref,                   # (1, 2)    f32
    o_ref,                    # (TB, 2)   f32
):
    cdt = w1_ref.dtype
    tb = t_ref.shape[0]
    n_pad = e0_ref.shape[0]

    # In-kernel embedding gather: one-hot(t) @ table on the MXU.
    steps = jax.lax.broadcasted_iota(jnp.int32, (tb, n_pad), 1)
    onehot = (t_ref[...] == steps).astype(cdt)                    # (TB, Np)
    e0 = jnp.dot(onehot, e0_ref[...], preferred_element_type=jnp.float32)
    e1 = jnp.dot(onehot, e1_ref[...], preferred_element_type=jnp.float32)
    e2 = jnp.dot(onehot, e2_ref[...], preferred_element_type=jnp.float32)

    # block 0: Linear(2->H) + (b0 + emb0[t]) + ReLU
    h = jnp.dot(x_ref[...].astype(cdt), w0_ref[...],
                preferred_element_type=jnp.float32)
    h = jnp.maximum(h + e0, 0.0)

    # block 1: Linear(H->H) + (b1 + emb1[t]) + ReLU
    h = jnp.dot(h.astype(cdt), w1_ref[...], preferred_element_type=jnp.float32)
    h = jnp.maximum(h + e1, 0.0)

    # block 2: Linear(H->H) + (b2 + emb2[t]) + ReLU
    h = jnp.dot(h.astype(cdt), w2_ref[...], preferred_element_type=jnp.float32)
    h = jnp.maximum(h + e2, 0.0)

    # final: Linear(H->2) + b3
    out = jnp.dot(h.astype(cdt), w3_ref[...], preferred_element_type=jnp.float32)
    o_ref[...] = (out + b3_ref[...]).astype(o_ref.dtype)


@functools.partial(jax.jit, static_argnames=("compute_dtype", "tile_b"))
def mlp_diffusion_forward(x, t, params, *, compute_dtype=jnp.bfloat16,
                          tile_b=512):
    """x: (B, 2) f32, t: (B,) int32, params: dict of weights."""
    B = x.shape[0]
    H = params["w1"].shape[0]
    n_steps = params["emb0"].shape[0]

    # --- glue (one-time per call, tiny): bias folding, casts, padding ------
    e0 = (params["emb0"] + params["b0"]).astype(compute_dtype)
    e1 = (params["emb1"] + params["b1"]).astype(compute_dtype)
    e2 = (params["emb2"] + params["b2"]).astype(compute_dtype)
    # Pad the step axis to a lane-friendly multiple of 128; padded rows are
    # never selected by the one-hot gather.
    n_pad = pl.cdiv(n_steps, 128) * 128
    if n_pad != n_steps:
        pad = ((0, n_pad - n_steps), (0, 0))
        e0, e1, e2 = (jnp.pad(e, pad) for e in (e0, e1, e2))

    w0 = params["w0"].astype(compute_dtype)
    w1 = params["w1"].astype(compute_dtype)
    w2 = params["w2"].astype(compute_dtype)
    w3 = params["w3"].astype(compute_dtype)
    b3 = params["b3"].reshape(1, 2).astype(jnp.float32)

    # Batch tiling (sublane-aligned); pad the batch to a multiple of the tile.
    tb = min(tile_b, pl.cdiv(B, 8) * 8)
    tb = pl.cdiv(tb, 8) * 8
    b_pad = pl.cdiv(B, tb) * tb
    x_p = jnp.pad(x.astype(jnp.float32), ((0, b_pad - B), (0, 0)))
    t_p = jnp.pad(t.astype(jnp.int32), (0, b_pad - B)).reshape(b_pad, 1)

    stream = lambda shape: pl.BlockSpec(shape, lambda i: (i, 0))
    resident = lambda shape: pl.BlockSpec(shape, lambda i: (0, 0))

    out = pl.pallas_call(
        _mlp_diffusion_kernel,
        out_shape=jax.ShapeDtypeStruct((b_pad, 2), jnp.float32),
        grid=(b_pad // tb,),
        in_specs=[
            stream((tb, 1)),        # t
            stream((tb, 2)),        # x
            resident((n_pad, H)),   # emb0 + b0
            resident((n_pad, H)),   # emb1 + b1
            resident((n_pad, H)),   # emb2 + b2
            resident((2, H)),       # w0
            resident((H, H)),       # w1
            resident((H, H)),       # w2
            resident((H, 2)),       # w3
            resident((1, 2)),       # b3
        ],
        out_specs=stream((tb, 2)),
        compiler_params=pltpu.CompilerParams(
            dimension_semantics=("parallel",)),
    )(t_p, x_p, e0, e1, e2, w0, w1, w2, w3, b3)
    return out[:B]


def init_params(key, n_steps, num_units=128):
    """Deterministic init mimicking PyTorch defaults (U(-1/sqrt(fan_in), +))."""
    ks = jax.random.split(key, 11)
    H = num_units

    def linear(kw, kb, fan_in, fan_out):
        bound = 1.0 / jnp.sqrt(fan_in)
        w = jax.random.uniform(kw, (fan_in, fan_out), jnp.float32, -bound, bound)
        b = jax.random.uniform(kb, (fan_out,), jnp.float32, -bound, bound)
        return w, b

    w0, b0 = linear(ks[0], ks[1], 2, H)
    w1, b1 = linear(ks[2], ks[3], H, H)
    w2, b2 = linear(ks[4], ks[5], H, H)
    w3, b3 = linear(ks[6], ks[7], H, 2)
    # nn.Embedding default init: N(0, 1)
    emb0 = jax.random.normal(ks[8], (n_steps, H), jnp.float32)
    emb1 = jax.random.normal(ks[9], (n_steps, H), jnp.float32)
    emb2 = jax.random.normal(ks[10], (n_steps, H), jnp.float32)
    return dict(w0=w0, b0=b0, w1=w1, b1=b1, w2=w2, b2=b2, w3=w3, b3=b3,
                emb0=emb0, emb1=emb1, emb2=emb2)


def reference_forward(x, t, p):
    """Pure-JAX f32 reference of the PyTorch forward."""
    h = x
    for wi, bi, ei in (("w0", "b0", "emb0"), ("w1", "b1", "emb1"),
                       ("w2", "b2", "emb2")):
        h = h @ p[wi] + p[bi]
        h = h + jnp.take(p[ei], t, axis=0)
        h = jnp.maximum(h, 0.0)
    return h @ p["w3"] + p["b3"]


if __name__ == "__main__":
    n_steps = 100
    num_units = 128
    batch = 8

    key = jax.random.PRNGKey(0)
    kp, kx, kt = jax.random.split(key, 3)

    params = init_params(kp, n_steps, num_units)
    x = jax.random.normal(kx, (batch, 2), jnp.float32)
    t = jax.random.randint(kt, (batch,), 0, n_steps, jnp.int32)

    ref = reference_forward(x, t, params)

    # f32 compute path: tight check against the pure-JAX reference.
    out_f32 = jax.block_until_ready(
        mlp_diffusion_forward(x, t, params, compute_dtype=jnp.float32))
    assert out_f32.shape == (batch, 2), out_f32.shape
    assert jnp.allclose(out_f32, ref, atol=1e-4, rtol=1e-4), (
        f"f32 max abs err {jnp.max(jnp.abs(out_f32 - ref))}")

    # bf16 MXU path (default fast path on v6e/v7x): looser tolerance.
    out_bf16 = jax.block_until_ready(mlp_diffusion_forward(x, t, params))
    assert out_bf16.shape == (batch, 2), out_bf16.shape
    assert jnp.allclose(out_bf16, ref, atol=5e-2, rtol=5e-2), (
        f"bf16 max abs err {jnp.max(jnp.abs(out_bf16 - ref))}")

    print("KERNEL_OK")
</pallas_src>

<mosaic_0001>
module attributes {stable_mosaic.version = 11 : i64} {
  func.func @_mlp_diffusion_kernel(%arg0: i32, %arg1: memref<8x1xi32, #tpu.memory_space<vmem>>, %arg2: memref<8x2xf32, #tpu.memory_space<vmem>>, %arg3: memref<128x128xf32, #tpu.memory_space<vmem>>, %arg4: memref<128x128xf32, #tpu.memory_space<vmem>>, %arg5: memref<128x128xf32, #tpu.memory_space<vmem>>, %arg6: memref<2x128xf32, #tpu.memory_space<vmem>>, %arg7: memref<128x128xf32, #tpu.memory_space<vmem>>, %arg8: memref<128x128xf32, #tpu.memory_space<vmem>>, %arg9: memref<128x2xf32, #tpu.memory_space<vmem>>, %arg10: memref<1x2xf32, #tpu.memory_space<vmem>>, %arg11: memref<8x2xf32, #tpu.memory_space<vmem>>) attributes {dimension_semantics = [#tpu.dimension_semantics<parallel>], iteration_bounds = array<i64: 1>, scalar_prefetch = 0 : i64, scratch_operands = 0 : i64, tpu.core_type = #tpu.core_type<tc>, window_params = [{transform_indices = @transform_0, window_bounds = array<i64: 8, 1>}, {transform_indices = @transform_1, window_bounds = array<i64: 8, 2>}, {pipeline_mode = #tpu.pipeline_mode<synchronous>, transform_indices = @transform_2, window_bounds = array<i64: 128, 128>}, {pipeline_mode = #tpu.pipeline_mode<synchronous>, transform_indices = @transform_3, window_bounds = array<i64: 128, 128>}, {pipeline_mode = #tpu.pipeline_mode<synchronous>, transform_indices = @transform_4, window_bounds = array<i64: 128, 128>}, {pipeline_mode = #tpu.pipeline_mode<synchronous>, transform_indices = @transform_5, window_bounds = array<i64: 2, 128>}, {pipeline_mode = #tpu.pipeline_mode<synchronous>, transform_indices = @transform_6, window_bounds = array<i64: 128, 128>}, {pipeline_mode = #tpu.pipeline_mode<synchronous>, transform_indices = @transform_7, window_bounds = array<i64: 128, 128>}, {pipeline_mode = #tpu.pipeline_mode<synchronous>, transform_indices = @transform_8, window_bounds = array<i64: 128, 2>}, {pipeline_mode = #tpu.pipeline_mode<synchronous>, transform_indices = @transform_9, window_bounds = array<i64: 1, 2>}, {transform_indices = @transform_10, window_bounds = array<i64: 8, 2>}]} {
    %0 = tpu.iota {dimensions = array<i32: 1>} : vector<8x128xi32>
    %c0 = arith.constant 0 : index
    %c0_0 = arith.constant 0 : index
    %1 = vector.load %arg1[%c0, %c0_0] : memref<8x1xi32, #tpu.memory_space<vmem>>, vector<8x1xi32>
    %2 = vector.broadcast %1 : vector<8x1xi32> to vector<8x128xi32>
    %3 = arith.cmpi eq, %2, %0 : vector<8x128xi32>
    %4 = arith.extui %3 : vector<8x128xi1> to vector<8x128xi32>
    %5 = arith.sitofp %4 : vector<8x128xi32> to vector<8x128xf32>
    %c0_1 = arith.constant 0 : index
    %c0_2 = arith.constant 0 : index
    %6 = vector.load %arg3[%c0_1, %c0_2] : memref<128x128xf32, #tpu.memory_space<vmem>>, vector<128x128xf32>
    %cst = arith.constant dense<0.000000e+00> : vector<8x128xf32>
    %7 = tpu.matmul %5, %6, %cst {dimension_numbers = #tpu.dot_dimension_numbers<[1], [0], [0], [1], [0, 0, 1, 1], [], []>} : vector<8x128xf32>, vector<128x128xf32>, vector<8x128xf32> -> vector<8x128xf32>
    %c0_3 = arith.constant 0 : index
    %c0_4 = arith.constant 0 : index
    %8 = vector.load %arg4[%c0_3, %c0_4] : memref<128x128xf32, #tpu.memory_space<vmem>>, vector<128x128xf32>
    %cst_5 = arith.constant dense<0.000000e+00> : vector<8x128xf32>
    %9 = tpu.matmul %5, %8, %cst_5 {dimension_numbers = #tpu.dot_dimension_numbers<[1], [0], [0], [1], [0, 0, 1, 1], [], []>} : vector<8x128xf32>, vector<128x128xf32>, vector<8x128xf32> -> vector<8x128xf32>
    %c0_6 = arith.constant 0 : index
    %c0_7 = arith.constant 0 : index
    %10 = vector.load %arg5[%c0_6, %c0_7] : memref<128x128xf32, #tpu.memory_space<vmem>>, vector<128x128xf32>
    %cst_8 = arith.constant dense<0.000000e+00> : vector<8x128xf32>
    %11 = tpu.matmul %5, %10, %cst_8 {dimension_numbers = #tpu.dot_dimension_numbers<[1], [0], [0], [1], [0, 0, 1, 1], [], []>} : vector<8x128xf32>, vector<128x128xf32>, vector<8x128xf32> -> vector<8x128xf32>
    %c0_9 = arith.constant 0 : index
    %c0_10 = arith.constant 0 : index
    %12 = vector.load %arg2[%c0_9, %c0_10] : memref<8x2xf32, #tpu.memory_space<vmem>>, vector<8x2xf32>
    %c0_11 = arith.constant 0 : index
    %c0_12 = arith.constant 0 : index
    %13 = vector.load %arg6[%c0_11, %c0_12] : memref<2x128xf32, #tpu.memory_space<vmem>>, vector<2x128xf32>
    %cst_13 = arith.constant dense<0.000000e+00> : vector<8x128xf32>
    %14 = tpu.matmul %12, %13, %cst_13 {dimension_numbers = #tpu.dot_dimension_numbers<[1], [0], [0], [1], [0, 0, 1, 1], [], []>} : vector<8x2xf32>, vector<2x128xf32>, vector<8x128xf32> -> vector<8x128xf32>
    %15 = arith.addf %14, %7 : vector<8x128xf32>
    %cst_14 = arith.constant 0.000000e+00 : f32
    %16 = vector.broadcast %cst_14 : f32 to vector<8x128xf32>
    %17 = arith.maximumf %15, %16 : vector<8x128xf32>
    %c0_15 = arith.constant 0 : index
    %c0_16 = arith.constant 0 : index
    %18 = vector.load %arg7[%c0_15, %c0_16] : memref<128x128xf32, #tpu.memory_space<vmem>>, vector<128x128xf32>
    %cst_17 = arith.constant dense<0.000000e+00> : vector<8x128xf32>
    %19 = tpu.matmul %17, %18, %cst_17 {dimension_numbers = #tpu.dot_dimension_numbers<[1], [0], [0], [1], [0, 0, 1, 1], [], []>} : vector<8x128xf32>, vector<128x128xf32>, vector<8x128xf32> -> vector<8x128xf32>
    %20 = arith.addf %19, %9 : vector<8x128xf32>
    %cst_18 = arith.constant 0.000000e+00 : f32
    %21 = vector.broadcast %cst_18 : f32 to vector<8x128xf32>
    %22 = arith.maximumf %20, %21 : vector<8x128xf32>
    %c0_19 = arith.constant 0 : index
    %c0_20 = arith.constant 0 : index
    %23 = vector.load %arg8[%c0_19, %c0_20] : memref<128x128xf32, #tpu.memory_space<vmem>>, vector<128x128xf32>
    %cst_21 = arith.constant dense<0.000000e+00> : vector<8x128xf32>
    %24 = tpu.matmul %22, %23, %cst_21 {dimension_numbers = #tpu.dot_dimension_numbers<[1], [0], [0], [1], [0, 0, 1, 1], [], []>} : vector<8x128xf32>, vector<128x128xf32>, vector<8x128xf32> -> vector<8x128xf32>
    %25 = arith.addf %24, %11 : vector<8x128xf32>
    %cst_22 = arith.constant 0.000000e+00 : f32
    %26 = vector.broadcast %cst_22 : f32 to vector<8x128xf32>
    %27 = arith.maximumf %25, %26 : vector<8x128xf32>
    %c0_23 = arith.constant 0 : index
    %c0_24 = arith.constant 0 : index
    %28 = vector.load %arg9[%c0_23, %c0_24] : memref<128x2xf32, #tpu.memory_space<vmem>>, vector<128x2xf32>
    %cst_25 = arith.constant dense<0.000000e+00> : vector<8x2xf32>
    %29 = tpu.matmul %27, %28, %cst_25 {dimension_numbers = #tpu.dot_dimension_numbers<[1], [0], [0], [1], [0, 0, 1, 1], [], []>} : vector<8x128xf32>, vector<128x2xf32>, vector<8x2xf32> -> vector<8x2xf32>
    %c0_26 = arith.constant 0 : index
    %c0_27 = arith.constant 0 : index
    %30 = vector.load %arg10[%c0_26, %c0_27] : memref<1x2xf32, #tpu.memory_space<vmem>>, vector<1x2xf32>
    %31 = vector.broadcast %30 : vector<1x2xf32> to vector<8x2xf32>
    %32 = arith.addf %29, %31 : vector<8x2xf32>
    %c0_28 = arith.constant 0 : index
    %c0_29 = arith.constant 0 : index
    %33 = vector.load %arg11[%c0_28, %c0_29] : memref<8x2xf32, #tpu.memory_space<vmem>>, vector<8x2xf32>
    tpu.vector_store %arg11[%c0_28, %c0_29], %32 {strides = array<i32>} : memref<8x2xf32, #tpu.memory_space<vmem>>, vector<8x2xf32>,
    return
  }
  func.func @transform_0(%arg0: i32) -> (i32, i32) {
    %c0_i32 = arith.constant 0 : i32
    %c0_i32_0 = arith.constant 0 : i32
    return %arg0, %c0_i32 : i32, i32
  }
  func.func @transform_1(%arg0: i32) -> (i32, i32) {
    %c0_i32 = arith.constant 0 : i32
    %c0_i32_0 = arith.constant 0 : i32
    return %arg0, %c0_i32 : i32, i32
  }
  func.func @transform_2(%arg0: i32) -> (i32, i32) {
    %c0_i32 = arith.constant 0 : i32
    %c0_i32_0 = arith.constant 0 : i32
    %c0_i32_1 = arith.constant 0 : i32
    return %c0_i32, %c0_i32_0 : i32, i32
  }
  func.func @transform_3(%arg0: i32) -> (i32, i32) {
    %c0_i32 = arith.constant 0 : i32
    %c0_i32_0 = arith.constant 0 : i32
    %c0_i32_1 = arith.constant 0 : i32
    return %c0_i32, %c0_i32_0 : i32, i32
  }
  func.func @transform_4(%arg0: i32) -> (i32, i32) {
    %c0_i32 = arith.constant 0 : i32
    %c0_i32_0 = arith.constant 0 : i32
    %c0_i32_1 = arith.constant 0 : i32
    return %c0_i32, %c0_i32_0 : i32, i32
  }
  func.func @transform_5(%arg0: i32) -> (i32, i32) {
    %c0_i32 = arith.constant 0 : i32
    %c0_i32_0 = arith.constant 0 : i32
    %c0_i32_1 = arith.constant 0 : i32
    return %c0_i32, %c0_i32_0 : i32, i32
  }
  func.func @transform_6(%arg0: i32) -> (i32, i32) {
    %c0_i32 = arith.constant 0 : i32
    %c0_i32_0 = arith.constant 0 : i32
    %c0_i32_1 = arith.constant 0 : i32
    return %c0_i32, %c0_i32_0 : i32, i32
  }
  func.func @transform_7(%arg0: i32) -> (i32, i32) {
    %c0_i32 = arith.constant 0 : i32
    %c0_i32_0 = arith.constant 0 : i32
    %c0_i32_1 = arith.constant 0 : i32
    return %c0_i32, %c0_i32_0 : i32, i32
  }
  func.func @transform_8(%arg0: i32) -> (i32, i32) {
    %c0_i32 = arith.constant 0 : i32
    %c0_i32_0 = arith.constant 0 : i32
    %c0_i32_1 = arith.constant 0 : i32
    return %c0_i32, %c0_i32_0 : i32, i32
  }
  func.func @transform_9(%arg0: i32) -> (i32, i32) {
    %c0_i32 = arith.constant 0 : i32
    %c0_i32_0 = arith.constant 0 : i32
    %c0_i32_1 = arith.constant 0 : i32
    return %c0_i32, %c0_i32_0 : i32, i32
  }
  func.func @transform_10(%arg0: i32) -> (i32, i32) {
    %c0_i32 = arith.constant 0 : i32
    %c0_i32_0 = arith.constant 0 : i32
    return %arg0, %c0_i32 : i32, i32
  }
}

</mosaic_0001>

<llo_original>
// kernel: mlp_diffusion_forward.1
$region0: #{mlp_diffusion_forward.1}
  #allocation0 [shape = 'u32[]', space=smem, size = 0x4, offset = 0x4, fixed_abs, tag = 'smem constant byte address 0x4 - core index']
  #allocation1 [shape = 'u32[144,128]{1,0:T(1,128)}', space=vmem, size = 0x12000, scoped, tag = 'internal scratch']
  %s0 = inlined_call_operand.vmem [shape: s32[8,1], index: 0, kind: input, shape index: {}]
  %s1 = inlined_call_operand.vmem [shape: f32[8,2], index: 1, kind: input, shape index: {}]
  %s2 = inlined_call_operand.vmem [shape: f32[128,128], index: 2, kind: input, shape index: {}]
  %s3 = inlined_call_operand.vmem [shape: f32[128,128], index: 3, kind: input, shape index: {}]
  %s4 = inlined_call_operand.vmem [shape: f32[128,128], index: 4, kind: input, shape index: {}]
  %s5 = inlined_call_operand.vmem [shape: f32[2,128], index: 5, kind: input, shape index: {}]
  %s6 = inlined_call_operand.vmem [shape: f32[128,128], index: 6, kind: input, shape index: {}]
  %s7 = inlined_call_operand.vmem [shape: f32[128,128], index: 7, kind: input, shape index: {}]
  %s8 = inlined_call_operand.vmem [shape: f32[128,2], index: 8, kind: input, shape index: {}]
  %s9 = inlined_call_operand.vmem [shape: f32[1,2], index: 9, kind: input, shape index: {}]
  %s10 = inlined_call_operand.vmem [shape: f32[8,2], index: 10, kind: output, shape index: {}]
  %s11 = sld [smem:[#allocation0]]
  $region50: #{mlp_diffusion_forward.1} parent=0
    _
  %s13 = ssub.s32 1, %s11
  %s14 = scalar_select 0, %s13, %s11
  // Predicated region
  $region2: #{mlp_diffusion_forward.1} parent=0 // pred_check
    _
  $region3: #{mlp_diffusion_forward.1} parent=0 // pred_check_branch
    %16 = sbr.rel (0) target = $region5
  $region4: #{mlp_diffusion_forward.1} parent=0 // pred_region
    _
  $region5: #{mlp_diffusion_forward.1} parent=0 // pred_fallthru
    _
  // Predicated region
  $region6: #{mlp_diffusion_forward.1} parent=0 // pred_check
    _
  $region7: #{mlp_diffusion_forward.1} parent=0 // pred_check_branch
    %18 = sbr.rel (0) target = $region9
  $region8: #{mlp_diffusion_forward.1} parent=0 // pred_region
    _
  $region9: #{mlp_diffusion_forward.1} parent=0 // pred_fallthru
    _
  // Predicated region
  $region10: #{mlp_diffusion_forward.1} parent=0 // pred_check
    _
  $region11: #{mlp_diffusion_forward.1} parent=0 // pred_check_branch
    %20 = sbr.rel (0) target = $region13
  $region12: #{mlp_diffusion_forward.1} parent=0 // pred_region
    _
  $region13: #{mlp_diffusion_forward.1} parent=0 // pred_fallthru
    _
  // Predicated region
  $region14: #{mlp_diffusion_forward.1} parent=0 // pred_check
    _
  $region15: #{mlp_diffusion_forward.1} parent=0 // pred_check_branch
    %22 = sbr.rel (0) target = $region17
  $region16: #{mlp_diffusion_forward.1} parent=0 // pred_region
    _
  $region17: #{mlp_diffusion_forward.1} parent=0 // pred_fallthru
    _
  // Predicated region
  $region18: #{mlp_diffusion_forward.1} parent=0 // pred_check
    _
  $region19: #{mlp_diffusion_forward.1} parent=0 // pred_check_branch
    %24 = sbr.rel (0) target = $region21
  $region20: #{mlp_diffusion_forward.1} parent=0 // pred_region
    _
  $region21: #{mlp_diffusion_forward.1} parent=0 // pred_fallthru
    _
  // Predicated region
  $region22: #{mlp_diffusion_forward.1} parent=0 // pred_check
    _
  $region23: #{mlp_diffusion_forward.1} parent=0 // pred_check_branch
    %26 = sbr.rel (0) target = $region25
  $region24: #{mlp_diffusion_forward.1} parent=0 // pred_region
    _
  $region25: #{mlp_diffusion_forward.1} parent=0 // pred_fallthru
    _
  // Predicated region
  $region26: #{mlp_diffusion_forward.1} parent=0 // pred_check
    _
  $region27: #{mlp_diffusion_forward.1} parent=0 // pred_check_branch
    %28 = sbr.rel (0) target = $region29
  $region28: #{mlp_diffusion_forward.1} parent=0 // pred_region
    _
  $region29: #{mlp_diffusion_forward.1} parent=0 // pred_fallthru
    _
  // Predicated region
  $region30: #{mlp_diffusion_forward.1} parent=0 // pred_check
    _
  $region31: #{mlp_diffusion_forward.1} parent=0 // pred_check_branch
    %30 = sbr.rel (0) target = $region33
  $region32: #{mlp_diffusion_forward.1} parent=0 // pred_region
    _
  $region33: #{mlp_diffusion_forward.1} parent=0 // pred_fallthru
    _
  // Predicated region
  $region34: #{mlp_diffusion_forward.1} parent=0 // pred_check
    _
  $region35: #{mlp_diffusion_forward.1} parent=0 // pred_check_branch
    %32 = sbr.rel (0) target = $region37
  $region36: #{mlp_diffusion_forward.1} parent=0 // pred_region
    _
  $region37: #{mlp_diffusion_forward.1} parent=0 // pred_fallthru
    _
  // Predicated region
  $region38: #{mlp_diffusion_forward.1} parent=0 // pred_check
    _
  $region39: #{mlp_diffusion_forward.1} parent=0 // pred_check_branch
    %34 = sbr.rel (0) target = $region41
  $region40: #{mlp_diffusion_forward.1} parent=0 // pred_region
    _
  $region41: #{mlp_diffusion_forward.1} parent=0 // pred_fallthru
    _
  %v35 = vlaneseq
  %v36 = vand.u32 %v35, 127
  %v37 = vld [vmem:[%s0] sm:$0xff]
  %38 = vset.pattern.permute.xlu0 0
  %39 = vperm.xlu0 %38, %v37
  %v40 = vpop.permute.xlu0 %39
  %vm41 = vcmp.eq.s32.totalorder %v40, %v36
  %v42 = vsel %vm41, 1, 0
  %v43 = vcvt.s32.f32 %v42
  %v44 = vld [vmem:[%s2] sm:$0xff]
  %v45 = vld [vmem:[%s2 + $0x8] sm:$0xff]
  %v46 = vld [vmem:[%s2 + $0x10] sm:$0xff]
  %v47 = vld [vmem:[%s2 + $0x18] sm:$0xff]
  %v48 = vld [vmem:[%s2 + $0x20] sm:$0xff]
  %v49 = vld [vmem:[%s2 + $0x28] sm:$0xff]
  %v50 = vld [vmem:[%s2 + $0x30] sm:$0xff]
  %v51 = vld [vmem:[%s2 + $0x38] sm:$0xff]
  %v52 = vld [vmem:[%s2 + $0x40] sm:$0xff]
  %v53 = vld [vmem:[%s2 + $0x48] sm:$0xff]
  %v54 = vld [vmem:[%s2 + $0x50] sm:$0xff]
  %v55 = vld [vmem:[%s2 + $0x58] sm:$0xff]
  %v56 = vld [vmem:[%s2 + $0x60] sm:$0xff]
  %v57 = vld [vmem:[%s2 + $0x68] sm:$0xff]
  %v58 = vld [vmem:[%s2 + $0x70] sm:$0xff]
  %v59 = vld [vmem:[%s2 + $0x78] sm:$0xff]
  %60 = vmatprep.subr.mxu0 0.0
  %61 = vmatpush1.msra.mxu0 %v59
  %62 = vmatprep.subr.mxu0 0.0
  %63 = vmatpush1.msra.mxu0 %v58
  %64 = vmatprep.subr.mxu0 0.0
  %65 = vmatpush1.msra.mxu0 %v57
  %66 = vmatprep.subr.mxu0 0.0
  %67 = vmatpush1.msra.mxu0 %v56
  %68 = vmatprep.subr.mxu0 0.0
  %69 = vmatpush1.msra.mxu0 %v55
  %70 = vmatprep.subr.mxu0 0.0
  %71 = vmatpush1.msra.mxu0 %v54
  %72 = vmatprep.subr.mxu0 0.0
  %73 = vmatpush1.msra.mxu0 %v53
  %74 = vmatprep.subr.mxu0 0.0
  %75 = vmatpush1.msra.mxu0 %v52
  %76 = vmatprep.subr.mxu0 0.0
  %77 = vmatpush1.msra.mxu0 %v51
  %78 = vmatprep.subr.mxu0 0.0
  %79 = vmatpush1.msra.mxu0 %v50
  %80 = vmatprep.subr.mxu0 0.0
  %81 = vmatpush1.msra.mxu0 %v49
  %82 = vmatprep.subr.mxu0 0.0
  %83 = vmatpush1.msra.mxu0 %v48
  %84 = vmatprep.subr.mxu0 0.0
  %85 = vmatpush1.msra.mxu0 %v47
  %86 = vmatprep.subr.mxu0 0.0
  %87 = vmatpush1.msra.mxu0 %v46
  %88 = vmatprep.subr.mxu0 0.0
  %89 = vmatpush1.msra.mxu0 %v45
  %90 = vmatprep.subr.mxu0 0.0
  %91 = vmatpush1.msra.mxu0 %v44
  %92 = vmatprep.subr.mxu0 0.0
  %93 = vmatpush2.msra.mxu0 0.0
  %94 = vmatprep.subr.mxu0 0.0
  %95 = vmatpush2.msra.mxu0 0.0
  %96 = vmatprep.subr.mxu0 0.0
  %97 = vmatpush2.msra.mxu0 0.0
  %98 = vmatprep.subr.mxu0 0.0
  %99 = vmatpush2.msra.mxu0 0.0
  %100 = vmatprep.subr.mxu0 0.0
  %101 = vmatpush2.msra.mxu0 0.0
  %102 = vmatprep.subr.mxu0 0.0
  %103 = vmatpush2.msra.mxu0 0.0
  %104 = vmatprep.subr.mxu0 0.0
  %105 = vmatpush2.msra.mxu0 0.0
  %106 = vmatprep.subr.mxu0 0.0
  %107 = vmatpush2.msra.mxu0 0.0
  %108 = vmatprep.subr.mxu0 0.0
  %109 = vmatpush2.msra.mxu0 0.0
  %110 = vmatprep.subr.mxu0 0.0
  %111 = vmatpush2.msra.mxu0 0.0
  %112 = vmatprep.subr.mxu0 0.0
  %113 = vmatpush2.msra.mxu0 0.0
  %114 = vmatprep.subr.mxu0 0.0
  %115 = vmatpush2.msra.mxu0 0.0
  %116 = vmatprep.subr.mxu0 0.0
  %117 = vmatpush2.msra.mxu0 0.0
  %118 = vmatprep.subr.mxu0 0.0
  %119 = vmatpush2.msra.mxu0 0.0
  %120 = vmatprep.subr.mxu0 0.0
  %121 = vmatpush2.msra.mxu0 0.0
  %122 = vmatprep.subr.mxu0 0.0
  %123 = vmatpush2.msra.mxu0 0.0
  %124 = vmatprep.mubr.f32.mxu0 0.0
  %125 = vmatmul.mubr.f32.gmra.mxu0 %v43
  %v126 = vpop.f32.mrf.mxu0
  %v127 = vadd.f32 0.0, %v126
  %v128 = vpop.f32.mrf.mxu0
  %129 = vdwg.mxu0
  %v130 = vld [vmem:[%s3] sm:$0xff]
  %v131 = vld [vmem:[%s3 + $0x8] sm:$0xff]
  %v132 = vld [vmem:[%s3 + $0x10] sm:$0xff]
  %v133 = vld [vmem:[%s3 + $0x18] sm:$0xff]
  %v134 = vld [vmem:[%s3 + $0x20] sm:$0xff]
  %v135 = vld [vmem:[%s3 + $0x28] sm:$0xff]
  %v136 = vld [vmem:[%s3 + $0x30] sm:$0xff]
  %v137 = vld [vmem:[%s3 + $0x38] sm:$0xff]
  %v138 = vld [vmem:[%s3 + $0x40] sm:$0xff]
  %v139 = vld [vmem:[%s3 + $0x48] sm:$0xff]
  %v140 = vld [vmem:[%s3 + $0x50] sm:$0xff]
  %v141 = vld [vmem:[%s3 + $0x58] sm:$0xff]
  %v142 = vld [vmem:[%s3 + $0x60] sm:$0xff]
  %v143 = vld [vmem:[%s3 + $0x68] sm:$0xff]
  %v144 = vld [vmem:[%s3 + $0x70] sm:$0xff]
  %v145 = vld [vmem:[%s3 + $0x78] sm:$0xff]
  %146 = vmatprep.subr.mxu0 0.0
  %147 = vmatpush1.msra.mxu0 %v145
  %148 = vmatprep.subr.mxu0 0.0
  %149 = vmatpush1.msra.mxu0 %v144
  %150 = vmatprep.subr.mxu0 0.0
  %151 = vmatpush1.msra.mxu0 %v143
  %152 = vmatprep.subr.mxu0 0.0
  %153 = vmatpush1.msra.mxu0 %v142
  %154 = vmatprep.subr.mxu0 0.0
  %155 = vmatpush1.msra.mxu0 %v141
  %156 = vmatprep.subr.mxu0 0.0
  %157 = vmatpush1.msra.mxu0 %v140
  %158 = vmatprep.subr.mxu0 0.0
  %159 = vmatpush1.msra.mxu0 %v139
  %160 = vmatprep.subr.mxu0 0.0
  %161 = vmatpush1.msra.mxu0 %v138
  %162 = vmatprep.subr.mxu0 0.0
  %163 = vmatpush1.msra.mxu0 %v137
  %164 = vmatprep.subr.mxu0 0.0
  %165 = vmatpush1.msra.mxu0 %v136
  %166 = vmatprep.subr.mxu0 0.0
  %167 = vmatpush1.msra.mxu0 %v135
  %168 = vmatprep.subr.mxu0 0.0
  %169 = vmatpush1.msra.mxu0 %v134
  %170 = vmatprep.subr.mxu0 0.0
  %171 = vmatpush1.msra.mxu0 %v133
  %172 = vmatprep.subr.mxu0 0.0
  %173 = vmatpush1.msra.mxu0 %v132
  %174 = vmatprep.subr.mxu0 0.0
  %175 = vmatpush1.msra.mxu0 %v131
  %176 = vmatprep.subr.mxu0 0.0
  %177 = vmatpush1.msra.mxu0 %v130
  %178 = vmatprep.subr.mxu0 0.0
  %179 = vmatpush2.msra.mxu0 0.0
  %180 = vmatprep.subr.mxu0 0.0
  %181 = vmatpush2.msra.mxu0 0.0
  %182 = vmatprep.subr.mxu0 0.0
  %183 = vmatpush2.msra.mxu0 0.0
  %184 = vmatprep.subr.mxu0 0.0
  %185 = vmatpush2.msra.mxu0 0.0
  %186 = vmatprep.subr.mxu0 0.0
  %187 = vmatpush2.msra.mxu0 0.0
  %188 = vmatprep.subr.mxu0 0.0
  %189 = vmatpush2.msra.mxu0 0.0
  %190 = vmatprep.subr.mxu0 0.0
  %191 = vmatpush2.msra.mxu0 0.0
  %192 = vmatprep.subr.mxu0 0.0
  %193 = vmatpush2.msra.mxu0 0.0
  %194 = vmatprep.subr.mxu0 0.0
  %195 = vmatpush2.msra.mxu0 0.0
  %196 = vmatprep.subr.mxu0 0.0
  %197 = vmatpush2.msra.mxu0 0.0
  %198 = vmatprep.subr.mxu0 0.0
  %199 = vmatpush2.msra.mxu0 0.0
  %200 = vmatprep.subr.mxu0 0.0
  %201 = vmatpush2.msra.mxu0 0.0
  %202 = vmatprep.subr.mxu0 0.0
  %203 = vmatpush2.msra.mxu0 0.0
  %204 = vmatprep.subr.mxu0 0.0
  %205 = vmatpush2.msra.mxu0 0.0
  %206 = vmatprep.subr.mxu0 0.0
  %207 = vmatpush2.msra.mxu0 0.0
  %208 = vmatprep.subr.mxu0 0.0
  %209 = vmatpush2.msra.mxu0 0.0
  %210 = vmatprep.mubr.f32.mxu0 0.0
  %211 = vmatmul.mubr.f32.gmra.mxu0 %v43
  %v212 = vpop.f32.mrf.mxu0
  %v213 = vadd.f32 0.0, %v212
  %v214 = vpop.f32.mrf.mxu0
  %215 = vdwg.mxu0
  %v216 = vld [vmem:[%s4] sm:$0xff]
  %v217 = vld [vmem:[%s4 + $0x8] sm:$0xff]
  %v218 = vld [vmem:[%s4 + $0x10] sm:$0xff]
  %v219 = vld [vmem:[%s4 + $0x18] sm:$0xff]
  %v220 = vld [vmem:[%s4 + $0x20] sm:$0xff]
  %v221 = vld [vmem:[%s4 + $0x28] sm:$0xff]
  %v222 = vld [vmem:[%s4 + $0x30] sm:$0xff]
  %v223 = vld [vmem:[%s4 + $0x38] sm:$0xff]
  %v224 = vld [vmem:[%s4 + $0x40] sm:$0xff]
  %v225 = vld [vmem:[%s4 + $0x48] sm:$0xff]
  %v226 = vld [vmem:[%s4 + $0x50] sm:$0xff]
  %v227 = vld [vmem:[%s4 + $0x58] sm:$0xff]
  %v228 = vld [vmem:[%s4 + $0x60] sm:$0xff]
  %v229 = vld [vmem:[%s4 + $0x68] sm:$0xff]
  %v230 = vld [vmem:[%s4 + $0x70] sm:$0xff]
  %v231 = vld [vmem:[%s4 + $0x78] sm:$0xff]
  %232 = vmatprep.subr.mxu0 0.0
  %233 = vmatpush1.msra.mxu0 %v231
  %234 = vmatprep.subr.mxu0 0.0
  %235 = vmatpush1.msra.mxu0 %v230
  %236 = vmatprep.subr.mxu0 0.0
  %237 = vmatpush1.msra.mxu0 %v229
  %238 = vmatprep.subr.mxu0 0.0
  %239 = vmatpush1.msra.mxu0 %v228
  %240 = vmatprep.subr.mxu0 0.0
  %241 = vmatpush1.msra.mxu0 %v227
  %242 = vmatprep.subr.mxu0 0.0
  %243 = vmatpush1.msra.mxu0 %v226
  %244 = vmatprep.subr.mxu0 0.0
  %245 = vmatpush1.msra.mxu0 %v225
  %246 = vmatprep.subr.mxu0 0.0
  %247 = vmatpush1.msra.mxu0 %v224
  %248 = vmatprep.subr.mxu0 0.0
  %249 = vmatpush1.msra.mxu0 %v223
  %250 = vmatprep.subr.mxu0 0.0
  %251 = vmatpush1.msra.mxu0 %v222
  %252 = vmatprep.subr.mxu0 0.0
  %253 = vmatpush1.msra.mxu0 %v221
  %254 = vmatprep.subr.mxu0 0.0
  %255 = vmatpush1.msra.mxu0 %v220
  %256 = vmatprep.subr.mxu0 0.0
  %257 = vmatpush1.msra.mxu0 %v219
  %258 = vmatprep.subr.mxu0 0.0
  %259 = vmatpush1.msra.mxu0 %v218
  %260 = vmatprep.subr.mxu0 0.0
  %261 = vmatpush1.msra.mxu0 %v217
  %262 = vmatprep.subr.mxu0 0.0
  %263 = vmatpush1.msra.mxu0 %v216
  %264 = vmatprep.subr.mxu0 0.0
  %265 = vmatpush2.msra.mxu0 0.0
  %266 = vmatprep.subr.mxu0 0.0
  %267 = vmatpush2.msra.mxu0 0.0
  %268 = vmatprep.subr.mxu0 0.0
  %269 = vmatpush2.msra.mxu0 0.0
  %270 = vmatprep.subr.mxu0 0.0
  %271 = vmatpush2.msra.mxu0 0.0
  %272 = vmatprep.subr.mxu0 0.0
  %273 = vmatpush2.msra.mxu0 0.0
  %274 = vmatprep.subr.mxu0 0.0
  %275 = vmatpush2.msra.mxu0 0.0
  %276 = vmatprep.subr.mxu0 0.0
  %277 = vmatpush2.msra.mxu0 0.0
  %278 = vmatprep.subr.mxu0 0.0
  %279 = vmatpush2.msra.mxu0 0.0
  %280 = vmatprep.subr.mxu0 0.0
  %281 = vmatpush2.msra.mxu0 0.0
  %282 = vmatprep.subr.mxu0 0.0
  %283 = vmatpush2.msra.mxu0 0.0
  %284 = vmatprep.subr.mxu0 0.0
  %285 = vmatpush2.msra.mxu0 0.0
  %286 = vmatprep.subr.mxu0 0.0
  %287 = vmatpush2.msra.mxu0 0.0
  %288 = vmatprep.subr.mxu0 0.0
  %289 = vmatpush2.msra.mxu0 0.0
  %290 = vmatprep.subr.mxu0 0.0
  %291 = vmatpush2.msra.mxu0 0.0
  %292 = vmatprep.subr.mxu0 0.0
  %293 = vmatpush2.msra.mxu0 0.0
  %294 = vmatprep.subr.mxu0 0.0
  %295 = vmatpush2.msra.mxu0 0.0
  %296 = vmatprep.mubr.f32.mxu0 0.0
  %297 = vmatmul.mubr.f32.gmra.mxu0 %v43
  %v298 = vpop.f32.mrf.mxu0
  %v299 = vadd.f32 0.0, %v298
  %v300 = vpop.f32.mrf.mxu0
  %301 = vdwg.mxu0
  %v302 = vld [vmem:[%s1] sm:$0xff]
  %v303 = vld [vmem:[%s5] sm:$0x3]
  %vm304 = vcmask 15360
  %v306 = vsel %vm304, %v302, 0
  %vm308 = vcmask 1041408
  %v310 = vsel %vm308, %v303, 0
  %312 = vmatprep.subr.mxu0 0.0
  %313 = vmatpush1.msra.mxu0 0.0
  %314 = vmatprep.subr.mxu0 0.0
  %315 = vmatpush1.msra.mxu0 0.0
  %316 = vmatprep.subr.mxu0 0.0
  %317 = vmatpush1.msra.mxu0 0.0
  %318 = vmatprep.subr.mxu0 0.0
  %319 = vmatpush1.msra.mxu0 0.0
  %320 = vmatprep.subr.mxu0 0.0
  %321 = vmatpush1.msra.mxu0 0.0
  %322 = vmatprep.subr.mxu0 0.0
  %323 = vmatpush1.msra.mxu0 0.0
  %324 = vmatprep.subr.mxu0 0.0
  %325 = vmatpush1.msra.mxu0 0.0
  %326 = vmatprep.subr.mxu0 0.0
  %327 = vmatpush1.msra.mxu0 0.0
  %328 = vmatprep.subr.mxu0 0.0
  %329 = vmatpush1.msra.mxu0 0.0
  %330 = vmatprep.subr.mxu0 0.0
  %331 = vmatpush1.msra.mxu0 0.0
  %332 = vmatprep.subr.mxu0 0.0
  %333 = vmatpush1.msra.mxu0 0.0
  %334 = vmatprep.subr.mxu0 0.0
  %335 = vmatpush1.msra.mxu0 0.0
  %336 = vmatprep.subr.mxu0 0.0
  %337 = vmatpush1.msra.mxu0 0.0
  %338 = vmatprep.subr.mxu0 0.0
  %339 = vmatpush1.msra.mxu0 0.0
  %340 = vmatprep.subr.mxu0 0.0
  %341 = vmatpush1.msra.mxu0 0.0
  %342 = vmatprep.subr.mxu0 0.0
  %343 = vmatpush1.msra.mxu0 %v310
  %344 = vmatprep.subr.mxu0 0.0
  %345 = vmatpush2.msra.mxu0 0.0
  %346 = vmatprep.subr.mxu0 0.0
  %347 = vmatpush2.msra.mxu0 0.0
  %348 = vmatprep.subr.mxu0 0.0
  %349 = vmatpush2.msra.mxu0 0.0
  %350 = vmatprep.subr.mxu0 0.0
  %351 = vmatpush2.msra.mxu0 0.0
  %352 = vmatprep.subr.mxu0 0.0
  %353 = vmatpush2.msra.mxu0 0.0
  %354 = vmatprep.subr.mxu0 0.0
  %355 = vmatpush2.msra.mxu0 0.0
  %356 = vmatprep.subr.mxu0 0.0
  %357 = vmatpush2.msra.mxu0 0.0
  %358 = vmatprep.subr.mxu0 0.0
  %359 = vmatpush2.msra.mxu0 0.0
  %360 = vmatprep.subr.mxu0 0.0
  %361 = vmatpush2.msra.mxu0 0.0
  %362 = vmatprep.subr.mxu0 0.0
  %363 = vmatpush2.msra.mxu0 0.0
  %364 = vmatprep.subr.mxu0 0.0
  %365 = vmatpush2.msra.mxu0 0.0
  %366 = vmatprep.subr.mxu0 0.0
  %367 = vmatpush2.msra.mxu0 0.0
  %368 = vmatprep.subr.mxu0 0.0
  %369 = vmatpush2.msra.mxu0 0.0
  %370 = vmatprep.subr.mxu0 0.0
  %371 = vmatpush2.msra.mxu0 0.0
  %372 = vmatprep.subr.mxu0 0.0
  %373 = vmatpush2.msra.mxu0 0.0
  %374 = vmatprep.subr.mxu0 0.0
  %375 = vmatpush2.msra.mxu0 0.0
  %376 = vmatprep.mubr.f32.mxu0 0.0
  %377 = vmatmul.mubr.f32.gmra.mxu0 %v306
  %v378 = vpop.f32.mrf.mxu0
  %v379 = vadd.f32 %v127, %v378
  %v380 = vpop.f32.mrf.mxu0
  %381 = vdwg.mxu0
  %v382 = vmax.f32 %v379, 0.0
  %v383 = vld [vmem:[%s6] sm:$0xff]
  %v384 = vld [vmem:[%s6 + $0x8] sm:$0xff]
  %v385 = vld [vmem:[%s6 + $0x10] sm:$0xff]
  %v386 = vld [vmem:[%s6 + $0x18] sm:$0xff]
  %v387 = vld [vmem:[%s6 + $0x20] sm:$0xff]
  %v388 = vld [vmem:[%s6 + $0x28] sm:$0xff]
  %v389 = vld [vmem:[%s6 + $0x30] sm:$0xff]
  %v390 = vld [vmem:[%s6 + $0x38] sm:$0xff]
  %v391 = vld [vmem:[%s6 + $0x40] sm:$0xff]
  %v392 = vld [vmem:[%s6 + $0x48] sm:$0xff]
  %v393 = vld [vmem:[%s6 + $0x50] sm:$0xff]
  %v394 = vld [vmem:[%s6 + $0x58] sm:$0xff]
  %v395 = vld [vmem:[%s6 + $0x60] sm:$0xff]
  %v396 = vld [vmem:[%s6 + $0x68] sm:$0xff]
  %v397 = vld [vmem:[%s6 + $0x70] sm:$0xff]
  %v398 = vld [vmem:[%s6 + $0x78] sm:$0xff]
  %399 = vmatprep.subr.mxu0 0.0
  %400 = vmatpush1.msra.mxu0 %v398
  %401 = vmatprep.subr.mxu0 0.0
  %402 = vmatpush1.msra.mxu0 %v397
  %403 = vmatprep.subr.mxu0 0.0
  %404 = vmatpush1.msra.mxu0 %v396
  %405 = vmatprep.subr.mxu0 0.0
  %406 = vmatpush1.msra.mxu0 %v395
  %407 = vmatprep.subr.mxu0 0.0
  %408 = vmatpush1.msra.mxu0 %v394
  %409 = vmatprep.subr.mxu0 0.0
  %410 = vmatpush1.msra.mxu0 %v393
  %411 = vmatprep.subr.mxu0 0.0
  %412 = vmatpush1.msra.mxu0 %v392
  %413 = vmatprep.subr.mxu0 0.0
  %414 = vmatpush1.msra.mxu0 %v391
  %415 = vmatprep.subr.mxu0 0.0
  %416 = vmatpush1.msra.mxu0 %v390
  %417 = vmatprep.subr.mxu0 0.0
  %418 = vmatpush1.msra.mxu0 %v389
  %419 = vmatprep.subr.mxu0 0.0
  %420 = vmatpush1.msra.mxu0 %v388
  %421 = vmatprep.subr.mxu0 0.0
  %422 = vmatpush1.msra.mxu0 %v387
  %423 = vmatprep.subr.mxu0 0.0
  %424 = vmatpush1.msra.mxu0 %v386
  %425 = vmatprep.subr.mxu0 0.0
  %426 = vmatpush1.msra.mxu0 %v385
  %427 = vmatprep.subr.mxu0 0.0
  %428 = vmatpush1.msra.mxu0 %v384
  %429 = vmatprep.subr.mxu0 0.0
  %430 = vmatpush1.msra.mxu0 %v383
  %431 = vmatprep.subr.mxu0 0.0
  %432 = vmatpush2.msra.mxu0 0.0
  %433 = vmatprep.subr.mxu0 0.0
  %434 = vmatpush2.msra.mxu0 0.0
  %435 = vmatprep.subr.mxu0 0.0
  %436 = vmatpush2.msra.mxu0 0.0
  %437 = vmatprep.subr.mxu0 0.0
  %438 = vmatpush2.msra.mxu0 0.0
  %439 = vmatprep.subr.mxu0 0.0
  %440 = vmatpush2.msra.mxu0 0.0
  %441 = vmatprep.subr.mxu0 0.0
  %442 = vmatpush2.msra.mxu0 0.0
  %443 = vmatprep.subr.mxu0 0.0
  %444 = vmatpush2.msra.mxu0 0.0
  %445 = vmatprep.subr.mxu0 0.0
  %446 = vmatpush2.msra.mxu0 0.0
  %447 = vmatprep.subr.mxu0 0.0
  %448 = vmatpush2.msra.mxu0 0.0
  %449 = vmatprep.subr.mxu0 0.0
  %450 = vmatpush2.msra.mxu0 0.0
  %451 = vmatprep.subr.mxu0 0.0
  %452 = vmatpush2.msra.mxu0 0.0
  %453 = vmatprep.subr.mxu0 0.0
  %454 = vmatpush2.msra.mxu0 0.0
  %455 = vmatprep.subr.mxu0 0.0
  %456 = vmatpush2.msra.mxu0 0.0
  %457 = vmatprep.subr.mxu0 0.0
  %458 = vmatpush2.msra.mxu0 0.0
  %459 = vmatprep.subr.mxu0 0.0
  %460 = vmatpush2.msra.mxu0 0.0
  %461 = vmatprep.subr.mxu0 0.0
  %462 = vmatpush2.msra.mxu0 0.0
  %463 = vmatprep.mubr.f32.mxu0 0.0
  %464 = vmatmul.mubr.f32.gmra.mxu0 %v382
  %v465 = vpop.f32.mrf.mxu0
  %v466 = vadd.f32 %v213, %v465
  %v467 = vpop.f32.mrf.mxu0
  %468 = vdwg.mxu0
  %v469 = vmax.f32 %v466, 0.0
  %v470 = vld [vmem:[%s7] sm:$0xff]
  %v471 = vld [vmem:[%s7 + $0x8] sm:$0xff]
  %v472 = vld [vmem:[%s7 + $0x10] sm:$0xff]
  %v473 = vld [vmem:[%s7 + $0x18] sm:$0xff]
  %v474 = vld [vmem:[%s7 + $0x20] sm:$0xff]
  %v475 = vld [vmem:[%s7 + $0x28] sm:$0xff]
  %v476 = vld [vmem:[%s7 + $0x30] sm:$0xff]
  %v477 = vld [vmem:[%s7 + $0x38] sm:$0xff]
  %v478 = vld [vmem:[%s7 + $0x40] sm:$0xff]
  %v479 = vld [vmem:[%s7 + $0x48] sm:$0xff]
  %v480 = vld [vmem:[%s7 + $0x50] sm:$0xff]
  %v481 = vld [vmem:[%s7 + $0x58] sm:$0xff]
  %v482 = vld [vmem:[%s7 + $0x60] sm:$0xff]
  %v483 = vld [vmem:[%s7 + $0x68] sm:$0xff]
  %v484 = vld [vmem:[%s7 + $0x70] sm:$0xff]
  %v485 = vld [vmem:[%s7 + $0x78] sm:$0xff]
  %486 = vmatprep.subr.mxu0 0.0
  %487 = vmatpush1.msra.mxu0 %v485
  %488 = vmatprep.subr.mxu0 0.0
  %489 = vmatpush1.msra.mxu0 %v484
  %490 = vmatprep.subr.mxu0 0.0
  %491 = vmatpush1.msra.mxu0 %v483
  %492 = vmatprep.subr.mxu0 0.0
  %493 = vmatpush1.msra.mxu0 %v482
  %494 = vmatprep.subr.mxu0 0.0
  %495 = vmatpush1.msra.mxu0 %v481
  %496 = vmatprep.subr.mxu0 0.0
  %497 = vmatpush1.msra.mxu0 %v480
  %498 = vmatprep.subr.mxu0 0.0
  %499 = vmatpush1.msra.mxu0 %v479
  %500 = vmatprep.subr.mxu0 0.0
  %501 = vmatpush1.msra.mxu0 %v478
  %502 = vmatprep.subr.mxu0 0.0
  %503 = vmatpush1.msra.mxu0 %v477
  %504 = vmatprep.subr.mxu0 0.0
  %505 = vmatpush1.msra.mxu0 %v476
  %506 = vmatprep.subr.mxu0 0.0
  %507 = vmatpush1.msra.mxu0 %v475
  %508 = vmatprep.subr.mxu0 0.0
  %509 = vmatpush1.msra.mxu0 %v474
  %510 = vmatprep.subr.mxu0 0.0
  %511 = vmatpush1.msra.mxu0 %v473
  %512 = vmatprep.subr.mxu0 0.0
  %513 = vmatpush1.msra.mxu0 %v472
  %514 = vmatprep.subr.mxu0 0.0
  %515 = vmatpush1.msra.mxu0 %v471
  %516 = vmatprep.subr.mxu0 0.0
  %517 = vmatpush1.msra.mxu0 %v470
  %518 = vmatprep.subr.mxu0 0.0
  %519 = vmatpush2.msra.mxu0 0.0
  %520 = vmatprep.subr.mxu0 0.0
  %521 = vmatpush2.msra.mxu0 0.0
  %522 = vmatprep.subr.mxu0 0.0
  %523 = vmatpush2.msra.mxu0 0.0
  %524 = vmatprep.subr.mxu0 0.0
  %525 = vmatpush2.msra.mxu0 0.0
  %526 = vmatprep.subr.mxu0 0.0
  %527 = vmatpush2.msra.mxu0 0.0
  %528 = vmatprep.subr.mxu0 0.0
  %529 = vmatpush2.msra.mxu0 0.0
  %530 = vmatprep.subr.mxu0 0.0
  %531 = vmatpush2.msra.mxu0 0.0
  %532 = vmatprep.subr.mxu0 0.0
  %533 = vmatpush2.msra.mxu0 0.0
  %534 = vmatprep.subr.mxu0 0.0
  %535 = vmatpush2.msra.mxu0 0.0
  %536 = vmatprep.subr.mxu0 0.0
  %537 = vmatpush2.msra.mxu0 0.0
  %538 = vmatprep.subr.mxu0 0.0
  %539 = vmatpush2.msra.mxu0 0.0
  %540 = vmatprep.subr.mxu0 0.0
  %541 = vmatpush2.msra.mxu0 0.0
  %542 = vmatprep.subr.mxu0 0.0
  %543 = vmatpush2.msra.mxu0 0.0
  %544 = vmatprep.subr.mxu0 0.0
  %545 = vmatpush2.msra.mxu0 0.0
  %546 = vmatprep.subr.mxu0 0.0
  %547 = vmatpush2.msra.mxu0 0.0
  %548 = vmatprep.subr.mxu0 0.0
  %549 = vmatpush2.msra.mxu0 0.0
  %550 = vmatprep.mubr.f32.mxu0 0.0
  %551 = vmatmul.mubr.f32.gmra.mxu0 %v469
  %v552 = vpop.f32.mrf.mxu0
  %v553 = vadd.f32 %v299, %v552
  %v554 = vpop.f32.mrf.mxu0
  %555 = vdwg.mxu0
  %v556 = vmax.f32 %v553, 0.0
  %v557 = vld [vmem:[%s8] sm:$0xff]
  %v558 = vld [vmem:[%s8 + $0x8] sm:$0xff]
  %v559 = vld [vmem:[%s8 + $0x10] sm:$0xff]
  %v560 = vld [vmem:[%s8 + $0x18] sm:$0xff]
  %v561 = vld [vmem:[%s8 + $0x20] sm:$0xff]
  %v562 = vld [vmem:[%s8 + $0x28] sm:$0xff]
  %v563 = vld [vmem:[%s8 + $0x30] sm:$0xff]
  %v564 = vld [vmem:[%s8 + $0x38] sm:$0xff]
  %v565 = vld [vmem:[%s8 + $0x40] sm:$0xff]
  %v566 = vld [vmem:[%s8 + $0x48] sm:$0xff]
  %v567 = vld [vmem:[%s8 + $0x50] sm:$0xff]
  %v568 = vld [vmem:[%s8 + $0x58] sm:$0xff]
  %v569 = vld [vmem:[%s8 + $0x60] sm:$0xff]
  %v570 = vld [vmem:[%s8 + $0x68] sm:$0xff]
  %v571 = vld [vmem:[%s8 + $0x70] sm:$0xff]
  %v572 = vld [vmem:[%s8 + $0x78] sm:$0xff]
  %v573 = vld [vmem:[%s9] sm:$0x1]
  %v575 = vlaneseq
  %v576 = vshrl.u32 %v575, 7
  %v577 = vsub.s32 0, %v576
  %v578 = vrot.slane %v573, %v577
  %580 = vmatprep.subr.mxu0 0.0
  %581 = vmatpush1.msra.mxu0 %v572
  %582 = vmatprep.subr.mxu0 0.0
  %583 = vmatpush1.msra.mxu0 %v571
  %584 = vmatprep.subr.mxu0 0.0
  %585 = vmatpush1.msra.mxu0 %v570
  %586 = vmatprep.subr.mxu0 0.0
  %587 = vmatpush1.msra.mxu0 %v569
  %588 = vmatprep.subr.mxu0 0.0
  %589 = vmatpush1.msra.mxu0 %v568
  %590 = vmatprep.subr.mxu0 0.0
  %591 = vmatpush1.msra.mxu0 %v567
  %592 = vmatprep.subr.mxu0 0.0
  %593 = vmatpush1.msra.mxu0 %v566
  %594 = vmatprep.subr.mxu0 0.0
  %595 = vmatpush1.msra.mxu0 %v565
  %596 = vmatprep.subr.mxu0 0.0
  %597 = vmatpush1.msra.mxu0 %v564
  %598 = vmatprep.subr.mxu0 0.0
  %599 = vmatpush1.msra.mxu0 %v563
  %600 = vmatprep.subr.mxu0 0.0
  %601 = vmatpush1.msra.mxu0 %v562
  %602 = vmatprep.subr.mxu0 0.0
  %603 = vmatpush1.msra.mxu0 %v561
  %604 = vmatprep.subr.mxu0 0.0
  %605 = vmatpush1.msra.mxu0 %v560
  %606 = vmatprep.subr.mxu0 0.0
  %607 = vmatpush1.msra.mxu0 %v559
  %608 = vmatprep.subr.mxu0 0.0
  %609 = vmatpush1.msra.mxu0 %v558
  %610 = vmatprep.subr.mxu0 0.0
  %611 = vmatpush1.msra.mxu0 %v557
  %612 = vmatprep.subr.mxu0 0.0
  %613 = vmatpush2.msra.mxu0 0.0
  %614 = vmatprep.subr.mxu0 0.0
  %615 = vmatpush2.msra.mxu0 0.0
  %616 = vmatprep.subr.mxu0 0.0
  %617 = vmatpush2.msra.mxu0 0.0
  %618 = vmatprep.subr.mxu0 0.0
  %619 = vmatpush2.msra.mxu0 0.0
  %620 = vmatprep.subr.mxu0 0.0
  %621 = vmatpush2.msra.mxu0 0.0
  %622 = vmatprep.subr.mxu0 0.0
  %623 = vmatpush2.msra.mxu0 0.0
  %624 = vmatprep.subr.mxu0 0.0
  %625 = vmatpush2.msra.mxu0 0.0
  %626 = vmatprep.subr.mxu0 0.0
  %627 = vmatpush2.msra.mxu0 0.0
  %628 = vmatprep.subr.mxu0 0.0
  %629 = vmatpush2.msra.mxu0 0.0
  %630 = vmatprep.subr.mxu0 0.0
  %631 = vmatpush2.msra.mxu0 0.0
  %632 = vmatprep.subr.mxu0 0.0
  %633 = vmatpush2.msra.mxu0 0.0
  %634 = vmatprep.subr.mxu0 0.0
  %635 = vmatpush2.msra.mxu0 0.0
  %636 = vmatprep.subr.mxu0 0.0
  %637 = vmatpush2.msra.mxu0 0.0
  %638 = vmatprep.subr.mxu0 0.0
  %639 = vmatpush2.msra.mxu0 0.0
  %640 = vmatprep.subr.mxu0 0.0
  %641 = vmatpush2.msra.mxu0 0.0
  %642 = vmatprep.subr.mxu0 0.0
  %643 = vmatpush2.msra.mxu0 0.0
  %644 = vmatprep.mubr.f32.mxu0 0.0
  %645 = vmatmul.mubr.f32.gmra.mxu0 %v556
  %v646 = vpop.f32.mrf.mxu0
  %v647 = vadd.f32 %v578, %v646
  %v648 = vpop.f32.mrf.mxu0
  %649 = vdwg.mxu0
  %650 = vst.msk [vmem:[%s10] sm:$0xff] %vm304, %v647
  // Predicated region
  $region42: #{mlp_diffusion_forward.1} parent=0 // pred_check
    _
  $region43: #{mlp_diffusion_forward.1} parent=0 // pred_check_branch
    %652 = sbr.rel (0) target = $region45
  $region44: #{mlp_diffusion_forward.1} parent=0 // pred_region
    _
  $region45: #{mlp_diffusion_forward.1} parent=0 // pred_fallthru
    _
  // Predicated region
  $region46: #{mlp_diffusion_forward.1} parent=0 // pred_check
    _
  $region47: #{mlp_diffusion_forward.1} parent=0 // pred_check_branch
    %654 = sbr.rel (0) target = $region49
  $region48: #{mlp_diffusion_forward.1} parent=0 // pred_region
    _
  $region49: #{mlp_diffusion_forward.1} parent=0 // pred_fallthru
    _

</llo_original>
